<compile_context>
chip_gen: v6e
topology: v6e:2x2x1
jax: 0.10.0
libtpu: 0.0.40
codegen_flags: <defaults>
</compile_context>

<pallas_src>
import numpy as np
import jax
import jax.numpy as jnp
from jax.experimental import pallas as pl
from jax.experimental.pallas import tpu as pltpu


# ----------------------------------------------------------------------------
# Deterministic parameter construction (librosa slaney mel filterbank + hann)
# ----------------------------------------------------------------------------
def _hz_to_mel(f):
    f = np.asarray(f, dtype=np.float64)
    f_sp = 200.0 / 3.0
    mels = f / f_sp
    min_log_hz = 1000.0
    min_log_mel = min_log_hz / f_sp
    logstep = np.log(6.4) / 27.0
    log_region = f >= min_log_hz
    mels = np.where(
        log_region,
        min_log_mel + np.log(np.maximum(f, 1e-10) / min_log_hz) / logstep,
        mels,
    )
    return mels


def _mel_to_hz(m):
    m = np.asarray(m, dtype=np.float64)
    f_sp = 200.0 / 3.0
    freqs = f_sp * m
    min_log_hz = 1000.0
    min_log_mel = min_log_hz / f_sp
    logstep = np.log(6.4) / 27.0
    log_region = m >= min_log_mel
    freqs = np.where(log_region, min_log_hz * np.exp(logstep * (m - min_log_mel)), freqs)
    return freqs


def librosa_mel_fn(sr, n_fft, n_mels, fmin, fmax=None):
    """Slaney-style mel filterbank (librosa defaults: htk=False, norm='slaney')."""
    if fmax is None:
        fmax = sr / 2.0
    n_freq = 1 + n_fft // 2
    fftfreqs = np.linspace(0.0, sr / 2.0, n_freq)
    mel_f = _mel_to_hz(np.linspace(_hz_to_mel(fmin), _hz_to_mel(fmax), n_mels + 2))
    fdiff = np.diff(mel_f)
    ramps = mel_f[:, None] - fftfreqs[None, :]
    weights = np.zeros((n_mels, n_freq), dtype=np.float64)
    for i in range(n_mels):
        lower = -ramps[i] / fdiff[i]
        upper = ramps[i + 2] / fdiff[i + 1]
        weights[i] = np.maximum(0.0, np.minimum(lower, upper))
    enorm = 2.0 / (mel_f[2 : n_mels + 2] - mel_f[:n_mels])
    weights *= enorm[:, None]
    return weights.astype(np.float32)


def hann_window_periodic(win_length):
    n = np.arange(win_length, dtype=np.float64)
    return (0.5 - 0.5 * np.cos(2.0 * np.pi * n / win_length)).astype(np.float32)


def _round_up(x, m):
    return ((x + m - 1) // m) * m


# ----------------------------------------------------------------------------
# Pallas kernel: fused windowed-DFT matmul + |.| + mel matmul + log + L1 partial
# ----------------------------------------------------------------------------
def _mel_l1_kernel(fp_ref, fy_ref, w_ref, melT_ref, out_ref):
    tile = fp_ref.shape[0]
    nfp = w_ref.shape[1] // 2

    # Stack prediction / target tiles on the M axis: one weight residency,
    # EUP sqrt/log of one stream hides under the other's matmul.
    frames = jnp.concatenate([fp_ref[...], fy_ref[...]], axis=0)      # (2T, n_fft) bf16

    # Single fused DFT matmul against [win*cos | win*sin]; f32 accumulation.
    reim = jnp.dot(frames, w_ref[...], preferred_element_type=jnp.float32)
    re = reim[:, :nfp]                                                # 128-aligned slice
    im = reim[:, nfp:]
    mag = jnp.sqrt(re * re + im * im)                                 # |STFT| (padded cols = 0)

    mel = jnp.dot(mag.astype(melT_ref.dtype), melT_ref[...],
                  preferred_element_type=jnp.float32)                 # (2T, MEL_PAD)
    logmel = jnp.log(jnp.maximum(mel, 1e-5))

    diff = jnp.abs(logmel[:tile] - logmel[tile:])                     # (T, MEL_PAD)
    partial = jnp.sum(diff, axis=0, keepdims=True)                    # (1, MEL_PAD), lane-dense
    out_ref[...] = partial.reshape(1, 1, partial.shape[-1])


# ----------------------------------------------------------------------------
# Python wrapper (module equivalent)
# ----------------------------------------------------------------------------
class HiFiGANMelLossPallas:
    def __init__(self, sr, n_fft, num_mels, hop_length, win_length, fmin, fmax=None):
        self.sr = sr
        self.n_fft = n_fft
        self.num_mels = num_mels
        self.hop_length = hop_length
        self.win_length = win_length
        self.n_freq = n_fft // 2 + 1
        self.mel_pad = _round_up(num_mels, 128)        # lane-dense mel column width

        mel_basis = librosa_mel_fn(sr=sr, n_fft=n_fft, n_mels=num_mels, fmin=fmin, fmax=fmax)

        # Drop trailing frequency bins whose mel weight column is identically
        # zero (always the Nyquist bin and anything above fmax): they cannot
        # contribute to the mel output, so skipping them in the DFT / sqrt /
        # mel matmul is numerically exact and shrinks the hot path.
        col_mass = np.abs(mel_basis).sum(axis=0)
        nz = np.flatnonzero(col_mass > 0.0)
        n_freq_used = int(nz[-1]) + 1 if nz.size else 1
        self.n_freq_used = n_freq_used
        self.n_freq_pad = _round_up(n_freq_used, 128)  # e.g. 129->128 used, 513->512 used

        # torch.stft centers a shorter window inside n_fft with zero padding.
        win = hann_window_periodic(win_length)
        if win_length < n_fft:
            lpad = (n_fft - win_length) // 2
            win = np.pad(win, (lpad, n_fft - win_length - lpad))

        # Real DFT matrices: X[k] = sum_n x[n] * exp(-2*pi*i*k*n/N); fold window in.
        n = np.arange(n_fft, dtype=np.float64)[:, None]
        k = np.arange(n_freq_used, dtype=np.float64)[None, :]
        ang = 2.0 * np.pi * n * k / n_fft
        cos_m = np.cos(ang) * win[:, None]
        sin_m = -np.sin(ang) * win[:, None]

        # Zero-pad the freq axis to a multiple of 128 and fuse [cos | sin].
        pad_f = self.n_freq_pad - n_freq_used
        cos_p = np.pad(cos_m, ((0, 0), (0, pad_f)))
        sin_p = np.pad(sin_m, ((0, 0), (0, pad_f)))
        W = np.concatenate([cos_p, sin_p], axis=1).astype(np.float32)   # (n_fft, 2*n_freq_pad)

        # Mel filterbank transposed, zero-padded on both axes (freq rows, mel cols).
        melT = np.zeros((self.n_freq_pad, self.mel_pad), dtype=np.float32)
        melT[:n_freq_used, :num_mels] = mel_basis[:, :n_freq_used].T

        # bf16 weights for MXU rate; accumulation stays f32 in-kernel.
        self.W = jnp.asarray(W, dtype=jnp.bfloat16)
        self.melT = jnp.asarray(melT, dtype=jnp.bfloat16)

        # Row-tile upper bound: amortize per-grid-step overhead; bounded so the
        # working set stays comfortably inside v7x's smaller VMEM budget.
        if n_fft <= 256:
            self.tile_max = 1024
        elif n_fft <= 1024:
            self.tile_max = 512
        else:
            self.tile_max = 256

        # f32, un-fused full-resolution copies kept only for the pure-JAX reference.
        ang_full = 2.0 * np.pi * n * np.arange(self.n_freq, dtype=np.float64)[None, :] / n_fft
        self._win_f32 = jnp.asarray(win.astype(np.float32).reshape(1, n_fft))
        self._cos_f32 = jnp.asarray(np.cos(ang_full).astype(np.float32))
        self._sin_f32 = jnp.asarray((-np.sin(ang_full)).astype(np.float32))
        self._melT_f32 = jnp.asarray(mel_basis.T.astype(np.float32))

    def _frame(self, x, dtype=None):
        """(B, T) -> (B*F, n_fft) overlapping frames (torch reflect-pad + stft(center=False))."""
        pad = (self.n_fft - self.hop_length) // 2
        x_pad = jnp.pad(x, ((0, 0), (pad, pad)), mode="reflect")
        if dtype is not None:
            x_pad = x_pad.astype(dtype)                          # cast BEFORE the gather
        L = x_pad.shape[1]
        num_frames = 1 + (L - self.n_fft) // self.hop_length
        idx = jnp.arange(num_frames)[:, None] * self.hop_length + jnp.arange(self.n_fft)[None, :]
        frames = x_pad[:, idx]                                   # (B, F, n_fft)
        return frames.reshape(-1, self.n_fft), num_frames

    def __call__(self, y_prediction, y):
        fp, _ = self._frame(y_prediction, dtype=jnp.bfloat16)
        fy, _ = self._frame(y, dtype=jnp.bfloat16)
        rows = fp.shape[0]                                       # true B*F element rows

        # Load-balanced tiling: smallest tile count given tile_max, tile rounded
        # up to 8 sublanes so tail padding in the last tile stays minimal.
        num_tiles = max(1, -(-rows // self.tile_max))
        tile = _round_up(-(-rows // num_tiles), 8)
        rows_pad = tile * num_tiles
        if rows_pad != rows:
            rpad = rows_pad - rows
            fp = jnp.pad(fp, ((0, rpad), (0, 0)))
            fy = jnp.pad(fy, ((0, rpad), (0, 0)))

        n_fft = self.n_fft
        nfp = self.n_freq_pad
        mel_pad = self.mel_pad
        rows2 = 2 * rows_pad
        cost = pl.CostEstimate(
            flops=2 * rows2 * n_fft * (2 * nfp) + 2 * rows2 * nfp * mel_pad,
            transcendentals=rows2 * nfp + rows2 * mel_pad,          # sqrt + log
            bytes_accessed=(2 * rows_pad * n_fft * 2                # fp + fy (bf16)
                            + n_fft * 2 * nfp * 2                   # fused DFT weights
                            + nfp * mel_pad * 2                     # mel weights
                            + num_tiles * mel_pad * 4),             # partial sums out
        )

        partials = pl.pallas_call(
            _mel_l1_kernel,
            out_shape=jax.ShapeDtypeStruct((num_tiles, 1, mel_pad), jnp.float32),
            grid_spec=pltpu.PrefetchScalarGridSpec(
                num_scalar_prefetch=0,
                grid=(num_tiles,),
                in_specs=[
                    pl.BlockSpec((tile, n_fft), lambda i: (i, 0)),          # pred frames
                    pl.BlockSpec((tile, n_fft), lambda i: (i, 0)),          # target frames
                    pl.BlockSpec((n_fft, 2 * nfp), lambda i: (0, 0)),       # fused DFT (resident)
                    pl.BlockSpec((nfp, mel_pad), lambda i: (0, 0)),         # mel (resident)
                ],
                out_specs=pl.BlockSpec((1, 1, mel_pad), lambda i: (i, 0, 0)),
            ),
            compiler_params=pltpu.CompilerParams(
                dimension_semantics=("parallel",),
                vmem_limit_bytes=48 * 1024 * 1024,
            ),
            cost_estimate=cost,
        )(fp, fy, self.W, self.melT)

        # Padded rows / freq columns / mel columns contribute exactly 0 to the sum,
        # so dividing by the TRUE element count reproduces nn.L1Loss() mean.
        return jnp.sum(partials) / (rows * self.num_mels)


# ----------------------------------------------------------------------------
# Pure-JAX reference (mirrors the torch module, f32 throughout, full n_freq)
# ----------------------------------------------------------------------------
def _reference_loss(mod, y_pred, y):
    def get_mel(x):
        frames, _ = mod._frame(x)                                  # f32 frames
        w = frames * mod._win_f32
        re = w @ mod._cos_f32
        im = w @ mod._sin_f32
        mag = jnp.sqrt(re * re + im * im)
        mel = mag @ mod._melT_f32                                  # (B*F, num_mels)
        return jnp.log(jnp.maximum(mel, 1e-5))
    return jnp.mean(jnp.abs(get_mel(y_pred) - get_mel(y)))


if __name__ == "__main__":
    # Small, consistent config (win_length == n_fft as in typical HiFiGAN configs).
    sr, n_fft, num_mels, hop, win, fmin = 16000, 256, 32, 64, 256, 0.0
    loss_mod = HiFiGANMelLossPallas(sr, n_fft, num_mels, hop, win, fmin, fmax=None)

    key = jax.random.PRNGKey(0)
    k1, k2 = jax.random.split(key)
    B, T = 2, 960
    y_pred = jax.random.normal(k1, (B, T), dtype=jnp.float32) * 0.1
    y_true = jax.random.normal(k2, (B, T), dtype=jnp.float32) * 0.1

    loss = loss_mod(y_pred, y_true)
    jax.block_until_ready(loss)

    ref = _reference_loss(loss_mod, y_pred, y_true)
    # Tolerance is relaxed vs the f32 reference because the kernel runs its
    # matmuls in bf16 (f32 accumulation); observed error is well under 1%.
    np.testing.assert_allclose(np.asarray(loss), np.asarray(ref), rtol=2e-2, atol=2e-2)

    print("KERNEL_OK")
</pallas_src>

<mosaic_0001>
module attributes {stable_mosaic.version = 11 : i64} {
  func.func @_mel_l1_kernel(%arg0: i32, %arg1: memref<32x256xbf16, #tpu.memory_space<vmem>>, %arg2: memref<32x256xbf16, #tpu.memory_space<vmem>>, %arg3: memref<256x256xbf16, #tpu.memory_space<vmem>>, %arg4: memref<128x128xbf16, #tpu.memory_space<vmem>>, %arg5: memref<1x1x128xf32, #tpu.memory_space<vmem>>) attributes {dimension_semantics = [#tpu.dimension_semantics<parallel>], iteration_bounds = array<i64: 1>, scalar_prefetch = 0 : i64, scratch_operands = 0 : i64, tpu.core_type = #tpu.core_type<tc>, window_params = [{transform_indices = @transform_0, window_bounds = array<i64: 32, 256>}, {transform_indices = @transform_1, window_bounds = array<i64: 32, 256>}, {pipeline_mode = #tpu.pipeline_mode<synchronous>, transform_indices = @transform_2, window_bounds = array<i64: 256, 256>}, {pipeline_mode = #tpu.pipeline_mode<synchronous>, transform_indices = @transform_3, window_bounds = array<i64: 128, 128>}, {transform_indices = @transform_4, window_bounds = array<i64: 1, 1, 128>}]} {
    %c0 = arith.constant 0 : index
    %c0_0 = arith.constant 0 : index
    %0 = vector.load %arg1[%c0, %c0_0] : memref<32x256xbf16, #tpu.memory_space<vmem>>, vector<32x256xbf16>
    %c0_1 = arith.constant 0 : index
    %c0_2 = arith.constant 0 : index
    %1 = vector.load %arg2[%c0_1, %c0_2] : memref<32x256xbf16, #tpu.memory_space<vmem>>, vector<32x256xbf16>
    %2 = tpu.concatenate %0, %1 in 0 : vector<32x256xbf16>, vector<32x256xbf16> -> vector<64x256xbf16>
    %c0_3 = arith.constant 0 : index
    %c0_4 = arith.constant 0 : index
    %3 = vector.load %arg3[%c0_3, %c0_4] : memref<256x256xbf16, #tpu.memory_space<vmem>>, vector<256x256xbf16>
    %cst = arith.constant dense<0.000000e+00> : vector<64x256xf32>
    %4 = tpu.matmul %2, %3, %cst {dimension_numbers = #tpu.dot_dimension_numbers<[1], [0], [0], [1], [0, 0, 1, 1], [], []>} : vector<64x256xbf16>, vector<256x256xbf16>, vector<64x256xf32> -> vector<64x256xf32>
    %5 = vector.extract_strided_slice %4 {offsets = [0, 0], sizes = [64, 128], strides = [1, 1]} : vector<64x256xf32> to vector<64x128xf32>
    %6 = vector.extract_strided_slice %4 {offsets = [0, 128], sizes = [64, 128], strides = [1, 1]} : vector<64x256xf32> to vector<64x128xf32>
    %7 = arith.mulf %5, %5 : vector<64x128xf32>
    %8 = arith.mulf %6, %6 : vector<64x128xf32>
    %9 = arith.addf %7, %8 : vector<64x128xf32>
    %10 = math.sqrt %9 : vector<64x128xf32>
    %11 = arith.truncf %10 : vector<64x128xf32> to vector<64x128xbf16>
    %c0_5 = arith.constant 0 : index
    %c0_6 = arith.constant 0 : index
    %12 = vector.load %arg4[%c0_5, %c0_6] : memref<128x128xbf16, #tpu.memory_space<vmem>>, vector<128x128xbf16>
    %cst_7 = arith.constant dense<0.000000e+00> : vector<64x128xf32>
    %13 = tpu.matmul %11, %12, %cst_7 {dimension_numbers = #tpu.dot_dimension_numbers<[1], [0], [0], [1], [0, 0, 1, 1], [], []>} : vector<64x128xbf16>, vector<128x128xbf16>, vector<64x128xf32> -> vector<64x128xf32>
    %cst_8 = arith.constant 9.99999974E-6 : f32
    %14 = vector.broadcast %cst_8 : f32 to vector<64x128xf32>
    %15 = arith.maximumf %13, %14 : vector<64x128xf32>
    %16 = math.log %15 : vector<64x128xf32>
    %17 = vector.extract_strided_slice %16 {offsets = [0, 0], sizes = [32, 128], strides = [1, 1]} : vector<64x128xf32> to vector<32x128xf32>
    %18 = vector.extract_strided_slice %16 {offsets = [32, 0], sizes = [32, 128], strides = [1, 1]} : vector<64x128xf32> to vector<32x128xf32>
    %19 = arith.subf %17, %18 : vector<32x128xf32>
    %20 = math.absf %19 : vector<32x128xf32>
    %cst_9 = arith.constant dense<0.000000e+00> : vector<128xf32>
    %21 = vector.multi_reduction <add>, %20, %cst_9 [0] : vector<32x128xf32> to vector<128xf32>
    %22 = vector.shape_cast %21 : vector<128xf32> to vector<1x128xf32>
    %23 = vector.shape_cast %22 : vector<1x128xf32> to vector<1x1x128xf32>
    %c0_10 = arith.constant 0 : index
    %c0_11 = arith.constant 0 : index
    %c0_12 = arith.constant 0 : index
    %24 = vector.load %arg5[%c0_10, %c0_11, %c0_12] : memref<1x1x128xf32, #tpu.memory_space<vmem>>, vector<1x1x128xf32>
    tpu.vector_store %arg5[%c0_10, %c0_11, %c0_12], %23 {strides = array<i32>} : memref<1x1x128xf32, #tpu.memory_space<vmem>>, vector<1x1x128xf32>,
    return
  }
  func.func @transform_0(%arg0: i32) -> (i32, i32) {
    %c0_i32 = arith.constant 0 : i32
    %c0_i32_0 = arith.constant 0 : i32
    return %arg0, %c0_i32 : i32, i32
  }
  func.func @transform_1(%arg0: i32) -> (i32, i32) {
    %c0_i32 = arith.constant 0 : i32
    %c0_i32_0 = arith.constant 0 : i32
    return %arg0, %c0_i32 : i32, i32
  }
  func.func @transform_2(%arg0: i32) -> (i32, i32) {
    %c0_i32 = arith.constant 0 : i32
    %c0_i32_0 = arith.constant 0 : i32
    %c0_i32_1 = arith.constant 0 : i32
    return %c0_i32, %c0_i32_0 : i32, i32
  }
  func.func @transform_3(%arg0: i32) -> (i32, i32) {
    %c0_i32 = arith.constant 0 : i32
    %c0_i32_0 = arith.constant 0 : i32
    %c0_i32_1 = arith.constant 0 : i32
    return %c0_i32, %c0_i32_0 : i32, i32
  }
  func.func @transform_4(%arg0: i32) -> (i32, i32, i32) {
    %c0_i32 = arith.constant 0 : i32
    %c0_i32_0 = arith.constant 0 : i32
    %c0_i32_1 = arith.constant 0 : i32
    return %arg0, %c0_i32, %c0_i32_0 : i32, i32, i32
  }
}

</mosaic_0001>

<llo_original>
// kernel: tpu_custom_call.1
$region0: #{tpu_custom_call.1}
  #allocation0 [shape = 'u32[]', space=smem, size = 0x4, offset = 0x4, fixed_abs, tag = 'smem constant byte address 0x4 - core index']
  #allocation1 [shape = 'u32[144,128]{1,0:T(1,128)}', space=vmem, size = 0x12000, scoped, tag = 'internal scratch']
  %s0 = inlined_call_operand.hbm [shape: bf16[32,256], index: 0, kind: input, shape index: {}]
  %s1 = inlined_call_operand.hbm [shape: bf16[32,256], index: 1, kind: input, shape index: {}]
  %s2 = inlined_call_operand.hbm [shape: bf16[256,256], index: 2, kind: input, shape index: {}]
  %s3 = inlined_call_operand.hbm [shape: bf16[128,128], index: 3, kind: input, shape index: {}]
  %s4 = inlined_call_operand.hbm [shape: f32[1,1,128], index: 4, kind: output, shape index: {}]
  %s5 = sld [smem:[#allocation0]]
  $region42: #{tpu_custom_call.1} parent=0
    _
  %s7 = ssub.s32 1, %s5
  %s8 = scalar_select 0, %s7, %s5
  $region1: #{tpu_custom_call.1} parent=0
    #allocation2 [shape = 'u8[16384]{0}', space=vmem, size = 0x4000, scoped, tag = 'input window, operand 0, single buffered']
    #allocation3 [shape = 's32[1]{0}', space=sflag, size = 0x4, scoped, tag = 'scoped memory for tpu_custom_call.1']
    #allocation4 [shape = 's32[1]{0}', space=sflag, size = 0x4, scoped, tag = 'scoped memory for tpu_custom_call.1']
    #allocation5 [shape = 'u8[16384]{0}', space=vmem, size = 0x4000, scoped, tag = 'input window, operand 1, single buffered']
    #allocation6 [shape = 's32[1]{0}', space=sflag, size = 0x4, scoped, tag = 'scoped memory for tpu_custom_call.1']
    #allocation7 [shape = 'u8[131072]{0}', space=vmem, size = 0x20000, scoped, tag = 'input window, operand 2, single buffered']
    #allocation8 [shape = 'u8[32768]{0}', space=vmem, size = 0x8000, scoped, tag = 'input window, operand 3, single buffered']
    #allocation9 [shape = 's32[1]{0}', space=sflag, size = 0x4, scoped, tag = 'scoped memory for tpu_custom_call.1']
    #allocation10 [shape = 'u8[512]{0}', space=vmem, size = 0x400, scoped, tag = 'output window, operand 0, single buffered']
    %9 = vsyncpa [#allocation3], 0
    %10 = vsyncpa [#allocation6], 0
    %11 = vsyncpa [#allocation9], 0
    %12 = vsyncpa [#allocation4], 0
    // Predicated region
    $region2: #{tpu_custom_call.1} parent=1 // pred_check
      _
    $region3: #{tpu_custom_call.1} parent=1 // pred_check_branch
      %14 = sbr.rel (0) target = $region5
    $region4: #{tpu_custom_call.1} parent=1 // pred_region
      %s16 = ssub.s32 512, 512
      %17 = vsyncadd [#allocation3], %s16
      %s18 = sshll.u32 [#allocation2], 4
      %s19 = int_to_ptr.vmem [resolvable:$true] %s18
      %24 = dma.hbm_to_vmem [thread:$0]  %s0, 512, %s19, [#allocation3], 128, 128, 8
    $region5: #{tpu_custom_call.1} parent=1 // pred_fallthru
      _
    // Predicated region
    $region6: #{tpu_custom_call.1} parent=1 // pred_check
      _
    $region7: #{tpu_custom_call.1} parent=1 // pred_check_branch
      %26 = sbr.rel (0) target = $region9
    $region8: #{tpu_custom_call.1} parent=1 // pred_region
      %s28 = ssub.s32 512, 512
      %29 = vsyncadd [#allocation6], %s28
      %s30 = sshll.u32 [#allocation5], 4
      %s31 = int_to_ptr.vmem [resolvable:$true] %s30
      %36 = dma.hbm_to_vmem [thread:$0]  %s1, 512, %s31, [#allocation6], 128, 128, 8
    $region9: #{tpu_custom_call.1} parent=1 // pred_fallthru
      _
    // Predicated region
    $region10: #{tpu_custom_call.1} parent=1 // pred_check
      _
    $region11: #{tpu_custom_call.1} parent=1 // pred_check_branch
      %38 = sbr.rel (0) target = $region13
    $region12: #{tpu_custom_call.1} parent=1 // pred_region
      %s40 = ssub.s32 4096, 4096
      %41 = vsyncadd [#allocation6], %s40
      %s42 = sshll.u32 [#allocation7], 4
      %s43 = int_to_ptr.vmem [resolvable:$true] %s42
      %48 = dma.hbm_to_vmem [thread:$0]  %s2, 4096, %s43, [#allocation6], 128, 128, 8
    $region13: #{tpu_custom_call.1} parent=1 // pred_fallthru
      _
    // Predicated region
    $region14: #{tpu_custom_call.1} parent=1 // pred_check
      _
    $region15: #{tpu_custom_call.1} parent=1 // pred_check_branch
      %50 = sbr.rel (0) target = $region17
    $region16: #{tpu_custom_call.1} parent=1 // pred_region
      %s52 = ssub.s32 1024, 1024
      %53 = vsyncadd [#allocation9], %s52
      %s54 = sshll.u32 [#allocation8], 4
      %s55 = int_to_ptr.vmem [resolvable:$true] %s54
      %60 = dma.hbm_to_vmem [thread:$0]  %s3, 1024, %s55, [#allocation9], 64, 64, 4
    $region17: #{tpu_custom_call.1} parent=1 // pred_fallthru
      _
    // Predicated region
    $region18: #{tpu_custom_call.1} parent=1 // pred_check
      _
    $region19: #{tpu_custom_call.1} parent=1 // pred_check_branch
      %62 = sbr.rel (0) target = $region21
    $region20: #{tpu_custom_call.1} parent=1 // pred_region
      %63 = dma.done [#allocation3], 512
    $region21: #{tpu_custom_call.1} parent=1 // pred_fallthru
      _
    // Predicated region
    $region22: #{tpu_custom_call.1} parent=1 // pred_check
      _
    $region23: #{tpu_custom_call.1} parent=1 // pred_check_branch
      %65 = sbr.rel (0) target = $region25
    $region24: #{tpu_custom_call.1} parent=1 // pred_region
      %66 = dma.done [#allocation6], 512
    $region25: #{tpu_custom_call.1} parent=1 // pred_fallthru
      _
    // Predicated region
    $region26: #{tpu_custom_call.1} parent=1 // pred_check
      _
    $region27: #{tpu_custom_call.1} parent=1 // pred_check_branch
      %68 = sbr.rel (0) target = $region29
    $region28: #{tpu_custom_call.1} parent=1 // pred_region
      %69 = dma.done [#allocation6], 4096
    $region29: #{tpu_custom_call.1} parent=1 // pred_fallthru
      _
    // Predicated region
    $region30: #{tpu_custom_call.1} parent=1 // pred_check
      _
    $region31: #{tpu_custom_call.1} parent=1 // pred_check_branch
      %71 = sbr.rel (0) target = $region33
    $region32: #{tpu_custom_call.1} parent=1 // pred_region
      %72 = dma.done [#allocation9], 1024
    $region33: #{tpu_custom_call.1} parent=1 // pred_fallthru
      _
    %v74 = vld [vmem:[#allocation2] sm:$0xff]
    %v75 = vld [vmem:[#allocation2 + $0x8] sm:$0xff]
    %v76 = vld [vmem:[#allocation2 + $0x10] sm:$0xff]
    %v77 = vld [vmem:[#allocation2 + $0x18] sm:$0xff]
    %v78 = vld [vmem:[#allocation5] sm:$0xff]
    %v79 = vld [vmem:[#allocation5 + $0x8] sm:$0xff]
    %v80 = vld [vmem:[#allocation5 + $0x10] sm:$0xff]
    %v81 = vld [vmem:[#allocation5 + $0x18] sm:$0xff]
    %v86 = vunpack.c.l.b16 %v74
    %v87 = vunpack.c.h.b16 %v74
    %v88 = vunpack.c.l.b16 %v75
    %v89 = vunpack.c.h.b16 %v75
    %v90 = vunpack.c.l.b16 %v76
    %v91 = vunpack.c.h.b16 %v76
    %v92 = vunpack.c.l.b16 %v77
    %v93 = vunpack.c.h.b16 %v77
    %v94 = vpack.c.b16 %v88, %v86
    %v95 = vpack.c.b16 %v89, %v87
    %v96 = vpack.c.b16 %v92, %v90
    %v97 = vpack.c.b16 %v93, %v91
    %v106 = vunpack.c.l.b16 %v78
    %v107 = vunpack.c.h.b16 %v78
    %v108 = vunpack.c.l.b16 %v79
    %v109 = vunpack.c.h.b16 %v79
    %v110 = vunpack.c.l.b16 %v80
    %v111 = vunpack.c.h.b16 %v80
    %v112 = vunpack.c.l.b16 %v81
    %v113 = vunpack.c.h.b16 %v81
    %v114 = vpack.c.b16 %v108, %v106
    %v115 = vpack.c.b16 %v109, %v107
    %v116 = vpack.c.b16 %v112, %v110
    %v117 = vpack.c.b16 %v113, %v111
    %v122 = vld [vmem:[#allocation7] sm:$0xff]
    %v123 = vld [vmem:[#allocation7 + $0x8] sm:$0xff]
    %v124 = vld [vmem:[#allocation7 + $0x10] sm:$0xff]
    %v125 = vld [vmem:[#allocation7 + $0x18] sm:$0xff]
    %v126 = vld [vmem:[#allocation7 + $0x20] sm:$0xff]
    %v127 = vld [vmem:[#allocation7 + $0x28] sm:$0xff]
    %v128 = vld [vmem:[#allocation7 + $0x30] sm:$0xff]
    %v129 = vld [vmem:[#allocation7 + $0x38] sm:$0xff]
    %v130 = vld [vmem:[#allocation7 + $0x40] sm:$0xff]
    %v131 = vld [vmem:[#allocation7 + $0x48] sm:$0xff]
    %v132 = vld [vmem:[#allocation7 + $0x50] sm:$0xff]
    %v133 = vld [vmem:[#allocation7 + $0x58] sm:$0xff]
    %v134 = vld [vmem:[#allocation7 + $0x60] sm:$0xff]
    %v135 = vld [vmem:[#allocation7 + $0x68] sm:$0xff]
    %v136 = vld [vmem:[#allocation7 + $0x70] sm:$0xff]
    %v137 = vld [vmem:[#allocation7 + $0x78] sm:$0xff]
    %v138 = vld [vmem:[#allocation7 + $0x80] sm:$0xff]
    %v139 = vld [vmem:[#allocation7 + $0x88] sm:$0xff]
    %v140 = vld [vmem:[#allocation7 + $0x90] sm:$0xff]
    %v141 = vld [vmem:[#allocation7 + $0x98] sm:$0xff]
    %v142 = vld [vmem:[#allocation7 + $0xa0] sm:$0xff]
    %v143 = vld [vmem:[#allocation7 + $0xa8] sm:$0xff]
    %v144 = vld [vmem:[#allocation7 + $0xb0] sm:$0xff]
    %v145 = vld [vmem:[#allocation7 + $0xb8] sm:$0xff]
    %v146 = vld [vmem:[#allocation7 + $0xc0] sm:$0xff]
    %v147 = vld [vmem:[#allocation7 + $0xc8] sm:$0xff]
    %v148 = vld [vmem:[#allocation7 + $0xd0] sm:$0xff]
    %v149 = vld [vmem:[#allocation7 + $0xd8] sm:$0xff]
    %v150 = vld [vmem:[#allocation7 + $0xe0] sm:$0xff]
    %v151 = vld [vmem:[#allocation7 + $0xe8] sm:$0xff]
    %v152 = vld [vmem:[#allocation7 + $0xf0] sm:$0xff]
    %v153 = vld [vmem:[#allocation7 + $0xf8] sm:$0xff]
    %v186 = vunpack.c.l.b16 %v122
    %v187 = vunpack.c.h.b16 %v122
    %v188 = vunpack.c.l.b16 %v123
    %v189 = vunpack.c.h.b16 %v123
    %v190 = vunpack.c.l.b16 %v124
    %v191 = vunpack.c.h.b16 %v124
    %v192 = vunpack.c.l.b16 %v125
    %v193 = vunpack.c.h.b16 %v125
    %v194 = vunpack.c.l.b16 %v126
    %v195 = vunpack.c.h.b16 %v126
    %v196 = vunpack.c.l.b16 %v127
    %v197 = vunpack.c.h.b16 %v127
    %v198 = vunpack.c.l.b16 %v128
    %v199 = vunpack.c.h.b16 %v128
    %v200 = vunpack.c.l.b16 %v129
    %v201 = vunpack.c.h.b16 %v129
    %v202 = vunpack.c.l.b16 %v130
    %v203 = vunpack.c.h.b16 %v130
    %v204 = vunpack.c.l.b16 %v131
    %v205 = vunpack.c.h.b16 %v131
    %v206 = vunpack.c.l.b16 %v132
    %v207 = vunpack.c.h.b16 %v132
    %v208 = vunpack.c.l.b16 %v133
    %v209 = vunpack.c.h.b16 %v133
    %v210 = vunpack.c.l.b16 %v134
    %v211 = vunpack.c.h.b16 %v134
    %v212 = vunpack.c.l.b16 %v135
    %v213 = vunpack.c.h.b16 %v135
    %v214 = vunpack.c.l.b16 %v136
    %v215 = vunpack.c.h.b16 %v136
    %v216 = vunpack.c.l.b16 %v137
    %v217 = vunpack.c.h.b16 %v137
    %v218 = vunpack.c.l.b16 %v138
    %v219 = vunpack.c.h.b16 %v138
    %v220 = vunpack.c.l.b16 %v139
    %v221 = vunpack.c.h.b16 %v139
    %v222 = vunpack.c.l.b16 %v140
    %v223 = vunpack.c.h.b16 %v140
    %v224 = vunpack.c.l.b16 %v141
    %v225 = vunpack.c.h.b16 %v141
    %v226 = vunpack.c.l.b16 %v142
    %v227 = vunpack.c.h.b16 %v142
    %v228 = vunpack.c.l.b16 %v143
    %v229 = vunpack.c.h.b16 %v143
    %v230 = vunpack.c.l.b16 %v144
    %v231 = vunpack.c.h.b16 %v144
    %v232 = vunpack.c.l.b16 %v145
    %v233 = vunpack.c.h.b16 %v145
    %v234 = vunpack.c.l.b16 %v146
    %v235 = vunpack.c.h.b16 %v146
    %v236 = vunpack.c.l.b16 %v147
    %v237 = vunpack.c.h.b16 %v147
    %v238 = vunpack.c.l.b16 %v148
    %v239 = vunpack.c.h.b16 %v148
    %v240 = vunpack.c.l.b16 %v149
    %v241 = vunpack.c.h.b16 %v149
    %v242 = vunpack.c.l.b16 %v150
    %v243 = vunpack.c.h.b16 %v150
    %v244 = vunpack.c.l.b16 %v151
    %v245 = vunpack.c.h.b16 %v151
    %v246 = vunpack.c.l.b16 %v152
    %v247 = vunpack.c.h.b16 %v152
    %v248 = vunpack.c.l.b16 %v153
    %v249 = vunpack.c.h.b16 %v153
    %v250 = vpack.c.b16 %v188, %v186
    %v251 = vpack.c.b16 %v189, %v187
    %v252 = vpack.c.b16 %v192, %v190
    %v253 = vpack.c.b16 %v193, %v191
    %v254 = vpack.c.b16 %v196, %v194
    %v255 = vpack.c.b16 %v197, %v195
    %v256 = vpack.c.b16 %v200, %v198
    %v257 = vpack.c.b16 %v201, %v199
    %v258 = vpack.c.b16 %v204, %v202
    %v259 = vpack.c.b16 %v205, %v203
    %v260 = vpack.c.b16 %v208, %v206
    %v261 = vpack.c.b16 %v209, %v207
    %v262 = vpack.c.b16 %v212, %v210
    %v263 = vpack.c.b16 %v213, %v211
    %v264 = vpack.c.b16 %v216, %v214
    %v265 = vpack.c.b16 %v217, %v215
    %v266 = vpack.c.b16 %v220, %v218
    %v267 = vpack.c.b16 %v221, %v219
    %v268 = vpack.c.b16 %v224, %v222
    %v269 = vpack.c.b16 %v225, %v223
    %v270 = vpack.c.b16 %v228, %v226
    %v271 = vpack.c.b16 %v229, %v227
    %v272 = vpack.c.b16 %v232, %v230
    %v273 = vpack.c.b16 %v233, %v231
    %v274 = vpack.c.b16 %v236, %v234
    %v275 = vpack.c.b16 %v237, %v235
    %v276 = vpack.c.b16 %v240, %v238
    %v277 = vpack.c.b16 %v241, %v239
    %v278 = vpack.c.b16 %v244, %v242
    %v279 = vpack.c.b16 %v245, %v243
    %v280 = vpack.c.b16 %v248, %v246
    %v281 = vpack.c.b16 %v249, %v247
    %314 = vmatprep.subr.bf16.mxu0 %v265
    %315 = vmatpush1.bf16.msra.mxu0 %v264
    %316 = vmatprep.subr.bf16.mxu0 %v263
    %317 = vmatpush1.bf16.msra.mxu0 %v262
    %318 = vmatprep.subr.bf16.mxu0 %v261
    %319 = vmatpush1.bf16.msra.mxu0 %v260
    %320 = vmatprep.subr.bf16.mxu0 %v259
    %321 = vmatpush1.bf16.msra.mxu0 %v258
    %322 = vmatprep.subr.bf16.mxu0 %v257
    %323 = vmatpush1.bf16.msra.mxu0 %v256
    %324 = vmatprep.subr.bf16.mxu0 %v255
    %325 = vmatpush1.bf16.msra.mxu0 %v254
    %326 = vmatprep.subr.bf16.mxu0 %v253
    %327 = vmatpush1.bf16.msra.mxu0 %v252
    %328 = vmatprep.subr.bf16.mxu0 %v251
    %329 = vmatpush1.bf16.msra.mxu0 %v250
    %330 = vmatprep.subr.bf16.mxu0 %v281
    %331 = vmatpush2.bf16.msra.mxu0 %v280
    %332 = vmatprep.subr.bf16.mxu0 %v279
    %333 = vmatpush2.bf16.msra.mxu0 %v278
    %334 = vmatprep.subr.bf16.mxu0 %v277
    %335 = vmatpush2.bf16.msra.mxu0 %v276
    %336 = vmatprep.subr.bf16.mxu0 %v275
    %337 = vmatpush2.bf16.msra.mxu0 %v274
    %338 = vmatprep.subr.bf16.mxu0 %v273
    %339 = vmatpush2.bf16.msra.mxu0 %v272
    %340 = vmatprep.subr.bf16.mxu0 %v271
    %341 = vmatpush2.bf16.msra.mxu0 %v270
    %342 = vmatprep.subr.bf16.mxu0 %v269
    %343 = vmatpush2.bf16.msra.mxu0 %v268
    %344 = vmatprep.subr.bf16.mxu0 %v267
    %345 = vmatpush2.bf16.msra.mxu0 %v266
    %346 = vmatprep.mubr.bf16.mxu0 %v95
    %347 = vmatmul.mubr.bf16.gmra.mxu0 %v94
    %v348 = vpop.f32.mrf.mxu0
    %v349 = vadd.f32 0.0, %v348
    %v350 = vpop.f32.mrf.mxu0
    %v351 = vadd.f32 0.0, %v350
    %v352 = vpop.f32.mrf.mxu0
    %v353 = vadd.f32 0.0, %v352
    %v354 = vpop.f32.mrf.mxu0
    %v355 = vadd.f32 0.0, %v354
    %356 = vmatprep.mubr.bf16.mxu0 %v97
    %357 = vmatmul.mubr.bf16.gmra.mxu0 %v96
    %v358 = vpop.f32.mrf.mxu0
    %v359 = vadd.f32 0.0, %v358
    %v360 = vpop.f32.mrf.mxu0
    %v361 = vadd.f32 0.0, %v360
    %v362 = vpop.f32.mrf.mxu0
    %v363 = vadd.f32 0.0, %v362
    %v364 = vpop.f32.mrf.mxu0
    %v365 = vadd.f32 0.0, %v364
    %366 = vmatprep.mubr.bf16.mxu0 %v115
    %367 = vmatmul.mubr.bf16.gmra.mxu0 %v114
    %v368 = vpop.f32.mrf.mxu0
    %v369 = vadd.f32 0.0, %v368
    %v370 = vpop.f32.mrf.mxu0
    %v371 = vadd.f32 0.0, %v370
    %v372 = vpop.f32.mrf.mxu0
    %v373 = vadd.f32 0.0, %v372
    %v374 = vpop.f32.mrf.mxu0
    %v375 = vadd.f32 0.0, %v374
    %376 = vmatprep.mubr.bf16.mxu0 %v117
    %377 = vmatmul.mubr.bf16.gmra.mxu0 %v116
    %v378 = vpop.f32.mrf.mxu0
    %v379 = vadd.f32 0.0, %v378
    %v380 = vpop.f32.mrf.mxu0
    %v381 = vadd.f32 0.0, %v380
    %v382 = vpop.f32.mrf.mxu0
    %v383 = vadd.f32 0.0, %v382
    %v384 = vpop.f32.mrf.mxu0
    %v385 = vadd.f32 0.0, %v384
    %386 = vdwg.mxu0
    %v387 = vmul.f32 %v349, %v349
    %v388 = vmul.f32 %v353, %v353
    %v389 = vmul.f32 %v359, %v359
    %v390 = vmul.f32 %v363, %v363
    %v391 = vmul.f32 %v369, %v369
    %v392 = vmul.f32 %v373, %v373
    %v393 = vmul.f32 %v379, %v379
    %v394 = vmul.f32 %v383, %v383
    %v395 = vmul.f32 %v351, %v351
    %v396 = vmul.f32 %v355, %v355
    %v397 = vmul.f32 %v361, %v361
    %v398 = vmul.f32 %v365, %v365
    %v399 = vmul.f32 %v371, %v371
    %v400 = vmul.f32 %v375, %v375
    %v401 = vmul.f32 %v381, %v381
    %v402 = vmul.f32 %v385, %v385
    %v403 = vadd.f32 %v387, %v395
    %v404 = vadd.f32 %v388, %v396
    %v405 = vadd.f32 %v389, %v397
    %v406 = vadd.f32 %v390, %v398
    %v407 = vadd.f32 %v391, %v399
    %v408 = vadd.f32 %v392, %v400
    %v409 = vadd.f32 %v393, %v401
    %v410 = vadd.f32 %v394, %v402
    %v411 = vrsqrt.pop %v403
    %v412 = vmul.f32 %v403, %v411
    %vm413 = vcmp.eq.f32.partialorder %v403, inf
    %v414 = vsel %vm413, %v403, %v412
    %vm415 = vcmp.eq.f32.partialorder %v403, 0.0
    %v416 = vand.u32 %v403, 2147483648
    %v417 = vsel %vm415, %v416, %v414
    %v418 = vrsqrt.pop %v404
    %v419 = vmul.f32 %v404, %v418
    %vm420 = vcmp.eq.f32.partialorder %v404, inf
    %v421 = vsel %vm420, %v404, %v419
    %vm422 = vcmp.eq.f32.partialorder %v404, 0.0
    %v423 = vand.u32 %v404, 2147483648
    %v424 = vsel %vm422, %v423, %v421
    %v425 = vrsqrt.pop %v405
    %v426 = vmul.f32 %v405, %v425
    %vm427 = vcmp.eq.f32.partialorder %v405, inf
    %v428 = vsel %vm427, %v405, %v426
    %vm429 = vcmp.eq.f32.partialorder %v405, 0.0
    %v430 = vand.u32 %v405, 2147483648
    %v431 = vsel %vm429, %v430, %v428
    %v432 = vrsqrt.pop %v406
    %v433 = vmul.f32 %v406, %v432
    %vm434 = vcmp.eq.f32.partialorder %v406, inf
    %v435 = vsel %vm434, %v406, %v433
    %vm436 = vcmp.eq.f32.partialorder %v406, 0.0
    %v437 = vand.u32 %v406, 2147483648
    %v438 = vsel %vm436, %v437, %v435
    %v439 = vrsqrt.pop %v407
    %v440 = vmul.f32 %v407, %v439
    %vm441 = vcmp.eq.f32.partialorder %v407, inf
    %v442 = vsel %vm441, %v407, %v440
    %vm443 = vcmp.eq.f32.partialorder %v407, 0.0
    %v444 = vand.u32 %v407, 2147483648
    %v445 = vsel %vm443, %v444, %v442
    %v446 = vrsqrt.pop %v408
    %v447 = vmul.f32 %v408, %v446
    %vm448 = vcmp.eq.f32.partialorder %v408, inf
    %v449 = vsel %vm448, %v408, %v447
    %vm450 = vcmp.eq.f32.partialorder %v408, 0.0
    %v451 = vand.u32 %v408, 2147483648
    %v452 = vsel %vm450, %v451, %v449
    %v453 = vrsqrt.pop %v409
    %v454 = vmul.f32 %v409, %v453
    %vm455 = vcmp.eq.f32.partialorder %v409, inf
    %v456 = vsel %vm455, %v409, %v454
    %vm457 = vcmp.eq.f32.partialorder %v409, 0.0
    %v458 = vand.u32 %v409, 2147483648
    %v459 = vsel %vm457, %v458, %v456
    %v460 = vrsqrt.pop %v410
    %v461 = vmul.f32 %v410, %v460
    %vm462 = vcmp.eq.f32.partialorder %v410, inf
    %v463 = vsel %vm462, %v410, %v461
    %vm464 = vcmp.eq.f32.partialorder %v410, 0.0
    %v465 = vand.u32 %v410, 2147483648
    %v466 = vsel %vm464, %v465, %v463
    %v467 = vpack.c.bf16 %v424, %v417
    %v468 = vpack.c.bf16 %v438, %v431
    %v469 = vpack.c.bf16 %v452, %v445
    %v470 = vpack.c.bf16 %v466, %v459
    %v471 = vld [vmem:[#allocation8] sm:$0xf]
    %v472 = vld [vmem:[#allocation8 + $0x4] sm:$0xf]
    %v473 = vld [vmem:[#allocation8 + $0x8] sm:$0xf]
    %v474 = vld [vmem:[#allocation8 + $0xc] sm:$0xf]
    %v475 = vld [vmem:[#allocation8 + $0x10] sm:$0xf]
    %v476 = vld [vmem:[#allocation8 + $0x14] sm:$0xf]
    %v477 = vld [vmem:[#allocation8 + $0x18] sm:$0xf]
    %v478 = vld [vmem:[#allocation8 + $0x1c] sm:$0xf]
    %v479 = vld [vmem:[#allocation8 + $0x20] sm:$0xf]
    %v480 = vld [vmem:[#allocation8 + $0x24] sm:$0xf]
    %v481 = vld [vmem:[#allocation8 + $0x28] sm:$0xf]
    %v482 = vld [vmem:[#allocation8 + $0x2c] sm:$0xf]
    %v483 = vld [vmem:[#allocation8 + $0x30] sm:$0xf]
    %v484 = vld [vmem:[#allocation8 + $0x34] sm:$0xf]
    %v485 = vld [vmem:[#allocation8 + $0x38] sm:$0xf]
    %v486 = vld [vmem:[#allocation8 + $0x3c] sm:$0xf]
    %v503 = vunpack.c.l.b16 %v471
    %v504 = vunpack.c.l.b16 %v472
    %v505 = vunpack.c.l.b16 %v473
    %v506 = vunpack.c.l.b16 %v474
    %v507 = vunpack.c.l.b16 %v475
    %v508 = vunpack.c.l.b16 %v476
    %v509 = vunpack.c.l.b16 %v477
    %v510 = vunpack.c.l.b16 %v478
    %v511 = vunpack.c.l.b16 %v479
    %v512 = vunpack.c.l.b16 %v480
    %v513 = vunpack.c.l.b16 %v481
    %v514 = vunpack.c.l.b16 %v482
    %v515 = vunpack.c.l.b16 %v483
    %v516 = vunpack.c.l.b16 %v484
    %v517 = vunpack.c.l.b16 %v485
    %v518 = vunpack.c.l.b16 %v486
    %v519 = vpack.c.b16 %v504, %v503
    %v520 = vpack.c.b16 %v506, %v505
    %v521 = vpack.c.b16 %v508, %v507
    %v522 = vpack.c.b16 %v510, %v509
    %v523 = vpack.c.b16 %v512, %v511
    %v524 = vpack.c.b16 %v514, %v513
    %v525 = vpack.c.b16 %v516, %v515
    %v526 = vpack.c.b16 %v518, %v517
    %535 = vmatprep.subr.bf16.mxu0 0
    %536 = vmatpush1.bf16.msra.mxu0 %v526
    %537 = vmatprep.subr.bf16.mxu0 0
    %538 = vmatpush1.bf16.msra.mxu0 %v525
    %539 = vmatprep.subr.bf16.mxu0 0
    %540 = vmatpush1.bf16.msra.mxu0 %v524
    %541 = vmatprep.subr.bf16.mxu0 0
    %542 = vmatpush1.bf16.msra.mxu0 %v523
    %543 = vmatprep.subr.bf16.mxu0 0
    %544 = vmatpush1.bf16.msra.mxu0 %v522
    %545 = vmatprep.subr.bf16.mxu0 0
    %546 = vmatpush1.bf16.msra.mxu0 %v521
    %547 = vmatprep.subr.bf16.mxu0 0
    %548 = vmatpush1.bf16.msra.mxu0 %v520
    %549 = vmatprep.subr.bf16.mxu0 0
    %550 = vmatpush1.bf16.msra.mxu0 %v519
    %551 = vmatprep.subr.bf16.mxu0 0
    %552 = vmatpush2.bf16.msra.mxu0 0
    %553 = vmatprep.subr.bf16.mxu0 0
    %554 = vmatpush2.bf16.msra.mxu0 0
    %555 = vmatprep.subr.bf16.mxu0 0
    %556 = vmatpush2.bf16.msra.mxu0 0
    %557 = vmatprep.subr.bf16.mxu0 0
    %558 = vmatpush2.bf16.msra.mxu0 0
    %559 = vmatprep.subr.bf16.mxu0 0
    %560 = vmatpush2.bf16.msra.mxu0 0
    %561 = vmatprep.subr.bf16.mxu0 0
    %562 = vmatpush2.bf16.msra.mxu0 0
    %563 = vmatprep.subr.bf16.mxu0 0
    %564 = vmatpush2.bf16.msra.mxu0 0
    %565 = vmatprep.subr.bf16.mxu0 0
    %566 = vmatpush2.bf16.msra.mxu0 0
    %567 = vmatprep.mubr.bf16.mxu0 0
    %568 = vmatmul.mubr.bf16.gmra.mxu0 %v467
    %v569 = vpop.f32.mrf.mxu0
    %v570 = vadd.f32 0.0, %v569
    %v571 = vpop.f32.mrf.mxu0
    %v572 = vpop.f32.mrf.mxu0
    %v573 = vadd.f32 0.0, %v572
    %v574 = vpop.f32.mrf.mxu0
    %575 = vmatprep.mubr.bf16.mxu0 0
    %576 = vmatmul.mubr.bf16.gmra.mxu0 %v468
    %v577 = vpop.f32.mrf.mxu0
    %v578 = vadd.f32 0.0, %v577
    %v579 = vpop.f32.mrf.mxu0
    %v580 = vpop.f32.mrf.mxu0
    %v581 = vadd.f32 0.0, %v580
    %v582 = vpop.f32.mrf.mxu0
    %583 = vmatprep.mubr.bf16.mxu0 0
    %584 = vmatmul.mubr.bf16.gmra.mxu0 %v469
    %v585 = vpop.f32.mrf.mxu0
    %v586 = vadd.f32 0.0, %v585
    %v587 = vpop.f32.mrf.mxu0
    %v588 = vpop.f32.mrf.mxu0
    %v589 = vadd.f32 0.0, %v588
    %v590 = vpop.f32.mrf.mxu0
    %591 = vmatprep.mubr.bf16.mxu0 0
    %592 = vmatmul.mubr.bf16.gmra.mxu0 %v470
    %v593 = vpop.f32.mrf.mxu0
    %v594 = vadd.f32 0.0, %v593
    %v595 = vpop.f32.mrf.mxu0
    %v596 = vpop.f32.mrf.mxu0
    %v597 = vadd.f32 0.0, %v596
    %v598 = vpop.f32.mrf.mxu0
    %599 = vdwg.mxu0
    %v600 = vmax.f32 %v570, 1e-05
    %v601 = vmax.f32 %v573, 1e-05
    %v602 = vmax.f32 %v578, 1e-05
    %v603 = vmax.f32 %v581, 1e-05
    %v604 = vmax.f32 %v586, 1e-05
    %v605 = vmax.f32 %v589, 1e-05
    %v606 = vmax.f32 %v594, 1e-05
    %v607 = vmax.f32 %v597, 1e-05
    %v608 = vlog2.pop %v600
    %v609 = vmul.f32 %v608, 0.6931472
    %v610 = vlog2.pop %v601
    %v611 = vmul.f32 %v610, 0.6931472
    %v612 = vlog2.pop %v602
    %v613 = vmul.f32 %v612, 0.6931472
    %v614 = vlog2.pop %v603
    %v615 = vmul.f32 %v614, 0.6931472
    %v616 = vlog2.pop %v604
    %v617 = vmul.f32 %v616, 0.6931472
    %v618 = vlog2.pop %v605
    %v619 = vmul.f32 %v618, 0.6931472
    %v620 = vlog2.pop %v606
    %v621 = vmul.f32 %v620, 0.6931472
    %v622 = vlog2.pop %v607
    %v623 = vmul.f32 %v622, 0.6931472
    %v624 = vsub.f32 %v609, %v617
    %v625 = vsub.f32 %v611, %v619
    %v626 = vsub.f32 %v613, %v621
    %v627 = vsub.f32 %v615, %v623
    %v628 = vand.u32 2147483647, %v624
    %v629 = vand.u32 2147483647, %v625
    %v630 = vand.u32 2147483647, %v626
    %v631 = vand.u32 2147483647, %v627
    %v632 = vadd.f32 %v628, %v629
    %v633 = vadd.f32 %v632, %v630
    %v634 = vadd.f32 %v633, %v631
    %v635 = vrot.slane %v634, 4
    %v636 = vadd.f32 %v634, %v635
    %v637 = vrot.slane %v636, 2
    %v638 = vadd.f32 %v636, %v637
    %v639 = vrot.slane %v638, 1
    %v640 = vadd.f32 %v638, %v639
    %641 = vst [vmem:[#allocation10] sm:$0x1] %v640
    // Predicated region
    $region34: #{tpu_custom_call.1} parent=1 // pred_check
      _
    $region35: #{tpu_custom_call.1} parent=1 // pred_check_branch
      %643 = sbr.rel (0) target = $region37
    $region36: #{tpu_custom_call.1} parent=1 // pred_region
      %s645 = ssub.s32 16, 16
      %646 = vsyncadd [#allocation4], %s645
      %s648 = sshll.u32 [#allocation10], 4
      %s649 = int_to_ptr.vmem [resolvable:$true] %s648
      %651 = dma.vmem_to_hbm [thread:$0]  %s649, 16, %s4, [#allocation4]
    $region37: #{tpu_custom_call.1} parent=1 // pred_fallthru
      _
    // Predicated region
    $region38: #{tpu_custom_call.1} parent=1 // pred_check
      _
    $region39: #{tpu_custom_call.1} parent=1 // pred_check_branch
      %653 = sbr.rel (0) target = $region41
    $region40: #{tpu_custom_call.1} parent=1 // pred_region
      %654 = dma.done [#allocation4], 16
    $region41: #{tpu_custom_call.1} parent=1 // pred_fallthru
      _
    %655 = vsyncpa [#allocation3], 1
    %656 = vsyncpa [#allocation6], 1
    %657 = vsyncpa [#allocation9], 1
    %658 = vsyncpa [#allocation4], 1

</llo_original>
